<compile_context>
chip_gen: v7x
topology: tpu7x:2x2x1
jax: 0.10.0
libtpu: 0.0.40
codegen_flags: <defaults>
</compile_context>

<pallas_src>
import math
import functools

import jax
import jax.numpy as jnp
from jax import lax
from jax.experimental import pallas as pl
from jax.experimental.pallas import tpu as pltpu


# ----------------------------------------------------------------------------
# Kernels
# ----------------------------------------------------------------------------
def _proj_kernel(x_ref, wcat_ref, xatt_ref, xtr_ref, *, f_pad):
    # Fused projection: [x@W2 | x@W] in a single bf16 MXU pass, f32 accumulation.
    x_cat = jnp.dot(x_ref[0], wcat_ref[...], preferred_element_type=jnp.float32)
    xatt_ref[0] = x_cat[:, :f_pad].astype(xatt_ref.dtype)   # 128-lane-aligned slice
    xtr_ref[0] = x_cat[:, f_pad:].astype(xtr_ref.dtype)


def _edge_kernel(xatt_ref, xtr_ref, adj_ref, wc_ref, edge_ref):
    # attention1 with q == word_context for every edge (rank-1 scores):
    #   p1[e, n] = adj[e, n] * exp(s[n] - c) / sum_n' adj[e, n'] * exp(s[n'] - c)
    # so edge = rowscale(adj @ (w * x_tr), adj @ w) with w = exp(s - max(s)).
    # The shared constant c cancels, so this is exact and removes every
    # O(E*N) exp / select / row-reduce of the naive masked-softmax path.
    x_att = xatt_ref[0]                          # (N, F_pad) bf16
    x_tr = xtr_ref[0]                            # (N, F_pad) bf16
    adj_b = adj_ref[0].astype(jnp.bfloat16)      # (tE, N) 0/1 values, widened once
    wc = wc_ref[...]                             # (1, F_pad) bf16, 1/temp folded in

    s = lax.dot_general(x_att, wc, (((1,), (1,)), ((), ())),
                        preferred_element_type=jnp.float32)           # (N, 1)
    w = jnp.exp(s - jnp.max(s))                                       # (N, 1), <= 1
    weighted = (x_tr.astype(jnp.float32) * w).astype(jnp.bfloat16)    # (N, F_pad)

    numer = jnp.dot(adj_b, weighted, preferred_element_type=jnp.float32)  # (tE, F_pad)
    denom = jnp.dot(adj_b, w.astype(jnp.bfloat16),
                    preferred_element_type=jnp.float32)                   # (tE, 1)
    # TODO(synk): a hyperedge with no incident node (all-zero adj row) divides by
    # zero here; the PyTorch -1e9 trick instead yields a uniform average there.
    edge_ref[0] = (numer * pl.reciprocal(denom, approx=True)).astype(edge_ref.dtype)


def _node_kernel(xatt_ref, edge_ref, adjT_ref, w3_ref, node_ref):
    # attention2: q = x_att (node tile), k = edge @ W3, v = edge, mask = adj^T.
    x_att = xatt_ref[0]                          # (tN, F_pad) bf16
    edge_b = edge_ref[0].astype(jnp.bfloat16)    # (E, F_pad)
    adjT = adjT_ref[0]                           # (tN, E) int8, compared directly
    w3 = w3_ref[...]                             # (F_pad, F_pad) bf16, 1/temp folded in

    edge_att = jnp.dot(edge_b, w3, preferred_element_type=jnp.float32)       # (E, F_pad)
    scores = lax.dot_general(x_att, edge_att.astype(jnp.bfloat16),
                             (((1,), (1,)), ((), ())),
                             preferred_element_type=jnp.float32)             # (tN, E)
    # Exact softmax without the -1e9 fill: subtract the raw row max (the shared
    # constant cancels), zero out masked columns, then normalize.
    p = jnp.exp(scores - jnp.max(scores, axis=-1, keepdims=True))
    p = jnp.where(adjT == 0, jnp.float32(0.0), p)
    denom = jnp.sum(p, axis=-1, keepdims=True)
    numer = jnp.dot(p.astype(jnp.bfloat16), edge_b,
                    preferred_element_type=jnp.float32)                      # (tN, F_pad)
    # TODO(synk): a node with no incident hyperedge divides by zero (see above).
    node_ref[0] = (numer * pl.reciprocal(denom, approx=True)).astype(node_ref.dtype)


# ----------------------------------------------------------------------------
# Wrapper
# ----------------------------------------------------------------------------
def _pick_tile(dim, target=128):
    """Largest tile <= target that divides dim exactly and is a multiple of 8
    (falls back to the full dimension, which Pallas always accepts)."""
    if dim <= target:
        return dim
    for t in range(target, 7, -8):
        if dim % t == 0:
            return t
    return dim


def _vmem_limit(block_bytes):
    # Double-buffered pipeline blocks + headroom for in-kernel intermediates,
    # capped at 48 MiB so the same sizing fits v7x's 64 MiB physical VMEM.
    est = 2 * int(block_bytes) + (8 << 20)
    return int(min(max(est, 16 << 20), 48 << 20))


def hypergraph_attention_forward(x, adj, weight, weight2, weight3, word_context,
                                 out_features):
    """Forward of HyperGraphAttentionLayerSparse (transfer=True, inference)."""
    # TODO(synk): only transfer=True is implemented (values are x @ weight);
    # dropout is identity (inference / p = 0.0).
    B, N, F_in = x.shape
    E = adj.shape[1]
    F_out = out_features
    F_pad = ((F_out + 127) // 128) * 128          # lane-dense feature width
    inv_temp = 1.0 / math.sqrt(float(F_out))
    f32, bf16 = jnp.float32, jnp.bfloat16

    # Zero-pad parameters to F_pad columns (exact: padded columns contribute 0),
    # fold 1/temperature into the query-side parameters, ship MXU operands bf16.
    w_pad = jnp.zeros((F_in, F_pad), f32).at[:, :F_out].set(weight.astype(f32))
    w2_pad = jnp.zeros((F_in, F_pad), f32).at[:, :F_out].set(weight2.astype(f32))
    w_cat = jnp.concatenate([w2_pad, w_pad], axis=1).astype(bf16)    # (F_in, 2*F_pad)
    w3_pad = jnp.zeros((F_pad, F_pad), f32).at[:F_out, :F_out].set(
        weight3.astype(f32) * inv_temp).astype(bf16)
    wc_pad = jnp.zeros((1, F_pad), f32).at[:, :F_out].set(
        word_context.reshape(1, -1).astype(f32) * inv_temp).astype(bf16)

    # int8 adjacency (and its transpose, produced HBM-side) to cut mask traffic 4x.
    adj_i8 = (adj != 0).astype(jnp.int8)                             # (B, E, N)
    adjT_i8 = jnp.transpose(adj_i8, (0, 2, 1))                       # (B, N, E)

    x_b = x.astype(bf16)

    tN = _pick_tile(N)
    tE = _pick_tile(E)
    nN, nE = N // tN, E // tE
    par2 = pltpu.CompilerParams  # shorthand

    # ---- phase 1: fused projection, tiled over N -----------------------------
    x_att, x_tr = pl.pallas_call(
        functools.partial(_proj_kernel, f_pad=F_pad),
        out_shape=(jax.ShapeDtypeStruct((B, N, F_pad), bf16),
                   jax.ShapeDtypeStruct((B, N, F_pad), bf16)),
        grid_spec=pltpu.PrefetchScalarGridSpec(
            num_scalar_prefetch=0,
            grid=(B, nN),
            in_specs=[
                pl.BlockSpec((1, tN, F_in), lambda b, n: (b, n, 0)),       # x (bf16)
                pl.BlockSpec((F_in, 2 * F_pad), lambda b, n: (0, 0)),      # [W2 | W]
            ],
            out_specs=[
                pl.BlockSpec((1, tN, F_pad), lambda b, n: (b, n, 0)),      # x_att
                pl.BlockSpec((1, tN, F_pad), lambda b, n: (b, n, 0)),      # x_tr
            ]),
        compiler_params=par2(
            dimension_semantics=("parallel", "parallel"),
            vmem_limit_bytes=_vmem_limit(
                tN * F_in * 2 + F_in * 2 * F_pad * 2 + 2 * tN * F_pad * 2)),
    )(x_b, w_cat)

    # ---- phase 2: attention1 (rank-1) -> edge, tiled over E ------------------
    edge_pad = pl.pallas_call(
        _edge_kernel,
        out_shape=jax.ShapeDtypeStruct((B, E, F_pad), f32),
        grid_spec=pltpu.PrefetchScalarGridSpec(
            num_scalar_prefetch=0,
            grid=(B, nE),
            in_specs=[
                pl.BlockSpec((1, N, F_pad), lambda b, e: (b, 0, 0)),       # x_att (full N)
                pl.BlockSpec((1, N, F_pad), lambda b, e: (b, 0, 0)),       # x_tr  (full N)
                pl.BlockSpec((1, tE, N), lambda b, e: (b, e, 0)),          # adj (int8)
                pl.BlockSpec((1, F_pad), lambda b, e: (0, 0)),             # word_context
            ],
            out_specs=pl.BlockSpec((1, tE, F_pad), lambda b, e: (b, e, 0)),
        ),
        compiler_params=par2(
            dimension_semantics=("parallel", "parallel"),
            vmem_limit_bytes=_vmem_limit(
                2 * N * F_pad * 2 + tE * N + F_pad * 2 + tE * F_pad * 4)),
    )(x_att, x_tr, adj_i8, wc_pad)

    # ---- phase 3: attention2 -> node, tiled over N ---------------------------
    node_pad = pl.pallas_call(
        _node_kernel,
        out_shape=jax.ShapeDtypeStruct((B, N, F_pad), f32),
        grid_spec=pltpu.PrefetchScalarGridSpec(
            num_scalar_prefetch=0,
            grid=(B, nN),
            in_specs=[
                pl.BlockSpec((1, tN, F_pad), lambda b, n: (b, n, 0)),      # x_att tile
                pl.BlockSpec((1, E, F_pad), lambda b, n: (b, 0, 0)),       # edge (full E)
                pl.BlockSpec((1, tN, E), lambda b, n: (b, n, 0)),          # adj^T (int8)
                pl.BlockSpec((F_pad, F_pad), lambda b, n: (0, 0)),         # W3
            ],
            out_specs=pl.BlockSpec((1, tN, F_pad), lambda b, n: (b, n, 0)),
        ),
        compiler_params=par2(
            dimension_semantics=("parallel", "parallel"),
            vmem_limit_bytes=_vmem_limit(
                tN * F_pad * 2 + E * F_pad * 4 + tN * E
                + F_pad * F_pad * 2 + tN * F_pad * 4)),
    )(x_att, edge_pad, adjT_i8, w3_pad)

    # Strip lane padding outside the kernels.
    return node_pad[:, :, :F_out], edge_pad[:, :, :F_out]


# ----------------------------------------------------------------------------
# Pure-JAX reference (f32) for correctness checking
# ----------------------------------------------------------------------------
def _reference_forward(x, adj, weight, weight2, weight3, word_context, out_features):
    temperature = float(out_features) ** 0.5
    x_att = x @ weight2
    x_tr = x @ weight
    B, N, _ = x.shape
    E = adj.shape[1]
    q1 = jnp.broadcast_to(word_context.reshape(1, 1, -1), (B, E, out_features))
    a1 = jnp.einsum('bef,bnf->ben', q1 / temperature, x_att)
    a1 = jnp.where(adj == 0, -1e9, a1)
    a1 = jax.nn.softmax(a1, axis=-1)
    edge = jnp.einsum('ben,bnf->bef', a1, x_tr)
    edge_att = edge @ weight3
    a2 = jnp.einsum('bnf,bef->bne', x_att / temperature, edge_att)
    a2 = jnp.where(jnp.transpose(adj, (0, 2, 1)) == 0, -1e9, a2)
    a2 = jax.nn.softmax(a2, axis=-1)
    node = jnp.einsum('bne,bef->bnf', a2, edge)
    return node, edge


if __name__ == "__main__":
    B, N, E = 2, 16, 8
    in_features, out_features = 32, 32
    stdv = 1.0 / math.sqrt(out_features)

    key = jax.random.PRNGKey(0)
    kx, kadj, kw, kw2, kw3, kwc = jax.random.split(key, 6)

    x = jax.random.normal(kx, (B, N, in_features), dtype=jnp.float32)
    adj = (jax.random.uniform(kadj, (B, E, N)) > 0.5).astype(jnp.float32)
    # Ensure every edge / node has at least one connection so softmax is sane.
    adj = adj.at[:, :, 0].set(1.0)
    adj = adj.at[:, 0, :].set(1.0)

    weight = jax.random.uniform(kw, (in_features, out_features),
                                minval=-stdv, maxval=stdv, dtype=jnp.float32)
    weight2 = jax.random.uniform(kw2, (in_features, out_features),
                                 minval=-stdv, maxval=stdv, dtype=jnp.float32)
    weight3 = jax.random.uniform(kw3, (out_features, out_features),
                                 minval=-stdv, maxval=stdv, dtype=jnp.float32)
    word_context = jax.random.uniform(kwc, (1, out_features),
                                      minval=-stdv, maxval=stdv, dtype=jnp.float32)

    node, edge = hypergraph_attention_forward(
        x, adj, weight, weight2, weight3, word_context, out_features)
    jax.block_until_ready((node, edge))

    node_ref, edge_ref = _reference_forward(
        x, adj, weight, weight2, weight3, word_context, out_features)
    # Tolerance sized for bf16 MXU operands (f32 accumulation) plus the EUP
    # approximate reciprocal on the softmax denominators (~0.5% relative).
    assert jnp.allclose(node, node_ref, atol=3e-2, rtol=3e-2), "node mismatch"
    assert jnp.allclose(edge, edge_ref, atol=3e-2, rtol=3e-2), "edge mismatch"

    print("KERNEL_OK")
</pallas_src>

<mosaic_0001>
module attributes {stable_mosaic.version = 11 : i64} {
  func.func @_proj_kernel(%arg0: i32, %arg1: i32, %arg2: memref<1x16x32xbf16, #tpu.memory_space<vmem>>, %arg3: memref<32x256xbf16, #tpu.memory_space<vmem>>, %arg4: memref<1x16x128xbf16, #tpu.memory_space<vmem>>, %arg5: memref<1x16x128xbf16, #tpu.memory_space<vmem>>) attributes {dimension_semantics = [#tpu.dimension_semantics<parallel>, #tpu.dimension_semantics<parallel>], iteration_bounds = array<i64: 2, 1>, scalar_prefetch = 0 : i64, scratch_operands = 0 : i64, tpu.core_type = #tpu.core_type<tc>, window_params = [{transform_indices = @transform_0, window_bounds = array<i64: 1, 16, 32>}, {pipeline_mode = #tpu.pipeline_mode<synchronous>, transform_indices = @transform_1, window_bounds = array<i64: 32, 256>}, {transform_indices = @transform_2, window_bounds = array<i64: 1, 16, 128>}, {transform_indices = @transform_3, window_bounds = array<i64: 1, 16, 128>}]} {
    %c0 = arith.constant 0 : index
    %c0_0 = arith.constant 0 : index
    %c0_1 = arith.constant 0 : index
    %0 = vector.load %arg2[%c0, %c0_0, %c0_1] : memref<1x16x32xbf16, #tpu.memory_space<vmem>>, vector<1x16x32xbf16>
    %1 = vector.shape_cast %0 : vector<1x16x32xbf16> to vector<16x32xbf16>
    %c0_2 = arith.constant 0 : index
    %c0_3 = arith.constant 0 : index
    %2 = vector.load %arg3[%c0_2, %c0_3] : memref<32x256xbf16, #tpu.memory_space<vmem>>, vector<32x256xbf16>
    %cst = arith.constant dense<0.000000e+00> : vector<16x256xf32>
    %3 = tpu.matmul %1, %2, %cst {dimension_numbers = #tpu.dot_dimension_numbers<[1], [0], [0], [1], [0, 0, 1, 1], [], []>} : vector<16x32xbf16>, vector<32x256xbf16>, vector<16x256xf32> -> vector<16x256xf32>
    %4 = vector.extract_strided_slice %3 {offsets = [0, 0], sizes = [16, 128], strides = [1, 1]} : vector<16x256xf32> to vector<16x128xf32>
    %5 = arith.truncf %4 : vector<16x128xf32> to vector<16x128xbf16>
    %c0_4 = arith.constant 0 : index
    %c0_5 = arith.constant 0 : index
    %c0_6 = arith.constant 0 : index
    %6 = vector.load %arg4[%c0_4, %c0_5, %c0_6] : memref<1x16x128xbf16, #tpu.memory_space<vmem>>, vector<1x16x128xbf16>
    %7 = vector.shape_cast %6 : vector<1x16x128xbf16> to vector<16x128xbf16>
    %8 = vector.shape_cast %5 : vector<16x128xbf16> to vector<1x16x128xbf16>
    tpu.vector_store %arg4[%c0_4, %c0_5, %c0_6], %8 {strides = array<i32>} : memref<1x16x128xbf16, #tpu.memory_space<vmem>>, vector<1x16x128xbf16>,
    %9 = vector.extract_strided_slice %3 {offsets = [0, 128], sizes = [16, 128], strides = [1, 1]} : vector<16x256xf32> to vector<16x128xf32>
    %10 = arith.truncf %9 : vector<16x128xf32> to vector<16x128xbf16>
    %c0_7 = arith.constant 0 : index
    %c0_8 = arith.constant 0 : index
    %c0_9 = arith.constant 0 : index
    %11 = vector.load %arg5[%c0_7, %c0_8, %c0_9] : memref<1x16x128xbf16, #tpu.memory_space<vmem>>, vector<1x16x128xbf16>
    %12 = vector.shape_cast %11 : vector<1x16x128xbf16> to vector<16x128xbf16>
    %13 = vector.shape_cast %10 : vector<16x128xbf16> to vector<1x16x128xbf16>
    tpu.vector_store %arg5[%c0_7, %c0_8, %c0_9], %13 {strides = array<i32>} : memref<1x16x128xbf16, #tpu.memory_space<vmem>>, vector<1x16x128xbf16>,
    return
  }
  func.func @transform_0(%arg0: i32, %arg1: i32) -> (i32, i32, i32) {
    %c0_i32 = arith.constant 0 : i32
    %c0_i32_0 = arith.constant 0 : i32
    return %arg0, %arg1, %c0_i32 : i32, i32, i32
  }
  func.func @transform_1(%arg0: i32, %arg1: i32) -> (i32, i32) {
    %c0_i32 = arith.constant 0 : i32
    %c0_i32_0 = arith.constant 0 : i32
    %c0_i32_1 = arith.constant 0 : i32
    return %c0_i32, %c0_i32_0 : i32, i32
  }
  func.func @transform_2(%arg0: i32, %arg1: i32) -> (i32, i32, i32) {
    %c0_i32 = arith.constant 0 : i32
    %c0_i32_0 = arith.constant 0 : i32
    return %arg0, %arg1, %c0_i32 : i32, i32, i32
  }
  func.func @transform_3(%arg0: i32, %arg1: i32) -> (i32, i32, i32) {
    %c0_i32 = arith.constant 0 : i32
    %c0_i32_0 = arith.constant 0 : i32
    return %arg0, %arg1, %c0_i32 : i32, i32, i32
  }
}

</mosaic_0001>

<llo_original>
// kernel: tpu_custom_call.1
$region0: #{tpu_custom_call.1}
  #allocation0 [shape = 'u32[]', space=smem, size = 0x4, offset = 0x4, fixed_abs, tag = 'smem constant byte address 0x4 - core index']
  #allocation1 [shape = 'u32[144,128]{1,0:T(1,128)}', space=vmem, size = 0x12000, scoped, tag = 'internal scratch']
  %s0 = inlined_call_operand.hbm [shape: bf16[2,16,32], index: 0, kind: input, shape index: {}]
  %s1 = inlined_call_operand.hbm [shape: bf16[32,256], index: 1, kind: input, shape index: {}]
  %s2 = inlined_call_operand.hbm [shape: bf16[2,16,128], index: 2, kind: output, shape index: {0}]
  %s3 = inlined_call_operand.hbm [shape: bf16[2,16,128], index: 3, kind: output, shape index: {1}]
  %4 = xla_tuple %s2, %s3
  %s5 = sld [smem:[#allocation0]]
  $region57: #{tpu_custom_call.1} parent=0
    _
  %s7 = ssub.s32 1, %s5
  %s8 = scalar_select 0, %s7, %s5
  $region1: #{tpu_custom_call.1} parent=0
    #allocation2 [shape = 'u8[8192]{0}', space=vmem, size = 0x2000, scoped, tag = 'input window, operand 0']
    #allocation3 [shape = 's32[2]{0}', space=sflag, size = 0x8, scoped, tag = 'scoped memory for tpu_custom_call.1']
    #allocation4 [shape = 's32[2]{0}', space=sflag, size = 0x8, scoped, tag = 'scoped memory for tpu_custom_call.1']
    #allocation5 [shape = 'u8[16384]{0}', space=vmem, size = 0x4000, scoped, tag = 'input window, operand 1, single buffered']
    #allocation6 [shape = 's32[1]{0}', space=sflag, size = 0x4, scoped, tag = 'scoped memory for tpu_custom_call.1']
    #allocation7 [shape = 'u8[8192]{0}', space=vmem, size = 0x2000, scoped, tag = 'output window, operand 0']
    #allocation8 [shape = 'u8[8192]{0}', space=vmem, size = 0x2000, scoped, tag = 'output window, operand 1']
    #allocation9 [shape = 's32[2]{0}', space=sflag, size = 0x8, scoped, tag = 'scoped memory for tpu_custom_call.1']
    %9 = vsyncpa [#allocation3], 0
    %s10 = scalar_lea.sflag [#allocation3], 1
    %11 = vsyncpa %s10, 0
    %12 = vsyncpa [#allocation6], 0
    %13 = vsyncpa [#allocation4], 0
    %s14 = scalar_lea.sflag [#allocation4], 1
    %15 = vsyncpa %s14, 0
    %16 = vsyncpa [#allocation9], 0
    %s17 = scalar_lea.sflag [#allocation9], 1
    %18 = vsyncpa %s17, 0
    loop: start=0, step=1, limit=4
    $region2: #{tpu_custom_call.1} parent=1 // loop_pre_header
      _
    $region3: #{tpu_custom_call.1} parent=1 // loop_header
      %s20 = sphi 0, %s24
      %p21 = scmp.ge.s32.totalorder %s20, 4
      %s27 = sphi 0, %s39
      %s28 = sphi 0, %s35
      %s29 = sphi 0, %s27
      %s30 = sphi 0, %s28
      %s31 = sphi 0, %s29
      %s32 = sphi 0, %s30
      %s44 = sphi 0, %s46
      %s47 = sphi 0, %s44
      %s48 = sphi 0, %s47
      %s64 = sphi 0, %s48
      %s68 = sphi 0, %s68
      %s70 = sphi 0, %s68
      %s71 = sphi 0, %s70
      %s85 = sphi 0, %s71
      %s93 = sphi 0, %s95
      %s96 = sphi 0, %s93
      %s97 = sphi 0, %s96
      %s113 = sphi 0, %s97
      %s121 = sphi 0, %s123
      %s124 = sphi 0, %s121
      %s125 = sphi 0, %s124
      %s141 = sphi 0, %s125
    $region4: #{tpu_custom_call.1} parent=1 // loop_header_branch
      %23 = sbr.rel (%p21) target = $region8
    $region5: #{tpu_custom_call.1} parent=1 // loop_body
      %s25 = ssub.s32 %s20, 1
      %s26 = ssub.s32 %s20, 2
      %s33 = sadd.s32 1, %s28
      %p34 = scmp.ge.s32.totalorder %s33, 1
      %s35 = scalar_select %p34, 0, %s33
      %s36 = sadd.s32 1, %s27
      %s37 = scalar_select %p34, %s36, %s27
      %p38 = scmp.ge.s32.totalorder %s37, 2
      %s39 = scalar_select %p38, 0, %s37
      %s40 = ssub.s32 %s27, %s39
      %s41 = ssub.s32 %s28, %s35
      %s42 = sor.u32 %s40, %s41
      %p43 = scmp.eq.s32.totalorder %s42, 0
      %s45 = sadd.s32 %s44, 1
      %s46 = scalar_select %p43, %s44, %s45
      %p49 = pneg %p43
      %p50 = scmp.eq.s32.totalorder %s20, 1
      %p51 = por %p49, %p50
      %p52 = scmp.ne.s32.totalorder %s44, %s47
      %p53 = scmp.eq.s32.totalorder %s20, 0
      %p54 = por %p52, %p53
      %p55 = scmp.ne.s32.totalorder %s44, %s47
      %p56 = scmp.eq.s32.totalorder %s25, 1
      %p57 = por %p55, %p56
      %p58 = scmp.ne.s32.totalorder %s47, %s48
      %p59 = scmp.eq.s32.totalorder %s25, 0
      %p60 = por %p58, %p59
      %p61 = scmp.ne.s32.totalorder %s47, %s48
      %p62 = scmp.eq.s32.totalorder %s26, 1
      %p63 = por %p61, %p62
      %p65 = scmp.ne.s32.totalorder %s48, %s64
      %p66 = scmp.eq.s32.totalorder %s26, 0
      %p67 = por %p65, %p66
      %s69 = sadd.s32 %s68, 1
      %p72 = scmp.eq.s32.totalorder %s20, 1
      %p73 = scmp.ne.s32.totalorder %s68, %s70
      %p74 = scmp.eq.s32.totalorder %s20, 0
      %p75 = por %p73, %p74
      %p76 = scmp.ne.s32.totalorder %s68, %s70
      %p77 = scmp.eq.s32.totalorder %s25, 1
      %p78 = por %p76, %p77
      %p79 = scmp.ne.s32.totalorder %s70, %s71
      %p80 = scmp.eq.s32.totalorder %s25, 0
      %p81 = por %p79, %p80
      %p82 = scmp.ne.s32.totalorder %s70, %s71
      %p83 = scmp.eq.s32.totalorder %s26, 1
      %p84 = por %p82, %p83
      %p86 = scmp.ne.s32.totalorder %s71, %s85
      %p87 = scmp.eq.s32.totalorder %s26, 0
      %p88 = por %p86, %p87
      %s89 = ssub.s32 %s27, %s39
      %s90 = ssub.s32 %s28, %s35
      %s91 = sor.u32 %s89, %s90
      %p92 = scmp.eq.s32.totalorder %s91, 0
      %s94 = sadd.s32 %s93, 1
      %s95 = scalar_select %p92, %s93, %s94
      %p98 = pneg %p92
      %p99 = scmp.eq.s32.totalorder %s20, 1
      %p100 = por %p98, %p99
      %p101 = scmp.ne.s32.totalorder %s93, %s96
      %p102 = scmp.eq.s32.totalorder %s20, 0
      %p103 = por %p101, %p102
      %p104 = scmp.ne.s32.totalorder %s93, %s96
      %p105 = scmp.eq.s32.totalorder %s25, 1
      %p106 = por %p104, %p105
      %p107 = scmp.ne.s32.totalorder %s96, %s97
      %p108 = scmp.eq.s32.totalorder %s25, 0
      %p109 = por %p107, %p108
      %p110 = scmp.ne.s32.totalorder %s96, %s97
      %p111 = scmp.eq.s32.totalorder %s26, 1
      %p112 = por %p110, %p111
      %p114 = scmp.ne.s32.totalorder %s97, %s113
      %p115 = scmp.eq.s32.totalorder %s26, 0
      %p116 = por %p114, %p115
      %s117 = ssub.s32 %s27, %s39
      %s118 = ssub.s32 %s28, %s35
      %s119 = sor.u32 %s117, %s118
      %p120 = scmp.eq.s32.totalorder %s119, 0
      %s122 = sadd.s32 %s121, 1
      %s123 = scalar_select %p120, %s121, %s122
      %p126 = pneg %p120
      %p127 = scmp.eq.s32.totalorder %s20, 1
      %p128 = por %p126, %p127
      %p129 = scmp.ne.s32.totalorder %s121, %s124
      %p130 = scmp.eq.s32.totalorder %s20, 0
      %p131 = por %p129, %p130
      %p132 = scmp.ne.s32.totalorder %s121, %s124
      %p133 = scmp.eq.s32.totalorder %s25, 1
      %p134 = por %p132, %p133
      %p135 = scmp.ne.s32.totalorder %s124, %s125
      %p136 = scmp.eq.s32.totalorder %s25, 0
      %p137 = por %p135, %p136
      %p138 = scmp.ne.s32.totalorder %s124, %s125
      %p139 = scmp.eq.s32.totalorder %s26, 1
      %p140 = por %p138, %p139
      %p142 = scmp.ne.s32.totalorder %s125, %s141
      %p143 = scmp.eq.s32.totalorder %s26, 0
      %p144 = por %p142, %p143
      %p145 = scmp.le.s32.totalorder 1, %s20
      %p146 = scmp.lt.s32.totalorder %s20, 3
      %p147 = pnand %p145, %p146
      %p148 = pneg %p147
      // Predicated region
      $region9: #{tpu_custom_call.1} parent=5 // pred_check
        _
      $region10: #{tpu_custom_call.1} parent=5 // pred_check_branch
        %150 = sbr.rel (%p147) target = $region12
      $region11: #{tpu_custom_call.1} parent=5 // pred_region
        %s151 = ssub.s32 %s20, 1
        // Predicated region
        $region13: #{tpu_custom_call.1} parent=11 // pred_check
          %p152 = pneg %p81
        $region14: #{tpu_custom_call.1} parent=11 // pred_check_branch
          %154 = sbr.rel (%p152) target = $region16
        $region15: #{tpu_custom_call.1} parent=11 // pred_region
          %s156 = ssub.s32 512, 512
          %157 = vsyncadd [#allocation6], %s156
          %s158 = sshll.u32 [#allocation5], 4
          %s159 = int_to_ptr.vmem [resolvable:$true] %s158
          %164 = dma.hbm_to_vmem [thread:$0]  %s1, 512, %s159, [#allocation6], 128, 128, 8
        $region16: #{tpu_custom_call.1} parent=11 // pred_fallthru
          _
      $region12: #{tpu_custom_call.1} parent=5 // pred_fallthru
        _
      %p165 = scmp.lt.s32.totalorder %s20, 2
      // Predicated region
      $region17: #{tpu_custom_call.1} parent=5 // pred_check
        %p166 = pneg %p165
      $region18: #{tpu_custom_call.1} parent=5 // pred_check_branch
        %168 = sbr.rel (%p166) target = $region20
      $region19: #{tpu_custom_call.1} parent=5 // pred_region
        // Predicated region
        $region21: #{tpu_custom_call.1} parent=19 // pred_check
          %p169 = pneg %p54
        $region22: #{tpu_custom_call.1} parent=19 // pred_check_branch
          %171 = sbr.rel (%p169) target = $region24
        $region23: #{tpu_custom_call.1} parent=19 // pred_region
          %s172 = sand.u32 %s44, 1
          %s173 = scalar_lea.sflag [#allocation3], %s172
          %s174 = sand.u32 %s44, 1
          %s175 = smul.addr %s174, 8
          %s176 = scalar_lea.vmem [#allocation2], %s175
          %s177 = smul.u32 2, %s28
          %s179 = ssub.s32 128, 128
          %180 = vsyncadd %s173, %s179
          %s181 = smul.addr %s27, 2
          %s182 = sadd.s32 %s177, %s181
          %s183 = smul.addr %s182, 64
          %s184 = scalar_lea.hbm %s0, %s183
          %s185 = sshll.u32 %s176, 4
          %s186 = int_to_ptr.vmem [resolvable:$true] %s185
          %191 = dma.hbm_to_vmem [thread:$0]  %s184, 128, %s186, %s173, 64, 64, 4
        $region24: #{tpu_custom_call.1} parent=19 // pred_fallthru
          _
      $region20: #{tpu_custom_call.1} parent=5 // pred_fallthru
        _
      %p192 = scmp.le.s32.totalorder 1, %s20
      %p193 = scmp.lt.s32.totalorder %s20, 3
      %p194 = pnand %p192, %p193
      %p195 = pneg %p194
      // Predicated region
      $region25: #{tpu_custom_call.1} parent=5 // pred_check
        _
      $region26: #{tpu_custom_call.1} parent=5 // pred_check_branch
        %197 = sbr.rel (%p194) target = $region28
      $region27: #{tpu_custom_call.1} parent=5 // pred_region
        %s198 = ssub.s32 %s20, 1
        %s199 = sand.u32 %s47, 1
        %s200 = scalar_lea.sflag [#allocation3], %s199
        %s201 = sand.u32 %s47, 1
        %s202 = smul.addr %s201, 8
        %s203 = scalar_lea.vmem [#allocation2], %s202
        // Predicated region
        $region29: #{tpu_custom_call.1} parent=27 // pred_check
          %p204 = pneg %p60
        $region30: #{tpu_custom_call.1} parent=27 // pred_check_branch
          %206 = sbr.rel (%p204) target = $region32
        $region31: #{tpu_custom_call.1} parent=27 // pred_region
          %207 = dma.done %s200, 128
        $region32: #{tpu_custom_call.1} parent=27 // pred_fallthru
          _
        // Predicated region
        $region33: #{tpu_custom_call.1} parent=27 // pred_check
          %p208 = pneg %p81
        $region34: #{tpu_custom_call.1} parent=27 // pred_check_branch
          %210 = sbr.rel (%p208) target = $region36
        $region35: #{tpu_custom_call.1} parent=27 // pred_region
          %211 = dma.done [#allocation6], 512
        $region36: #{tpu_custom_call.1} parent=27 // pred_fallthru
          _
        %s212 = sand.u32 %s47, 1
        %s213 = scalar_lea.sflag [#allocation3], %s212
        %s214 = sand.u32 %s47, 1
        %s215 = smul.addr %s214, 8
        %s216 = scalar_lea.vmem [#allocation2], %s215
        %p217 = pneg %p60
        %p218 = pneg %p57
        %p219 = pneg %p81
        %p220 = pneg %p78
        %p221 = pneg %p109
        %p222 = pneg %p106
        %s223 = sand.u32 %s96, 1
        %s224 = scalar_lea.sflag [#allocation4], %s223
        %s225 = sand.u32 %s96, 1
        %s226 = smul.addr %s225, 8
        %s227 = scalar_lea.vmem [#allocation7], %s226
        %p228 = pneg %p137
        %p229 = pneg %p134
        %s230 = sand.u32 %s124, 1
        %s231 = scalar_lea.sflag [#allocation9], %s230
        %s232 = sand.u32 %s124, 1
        %s233 = smul.addr %s232, 8
        %s234 = scalar_lea.vmem [#allocation8], %s233
        %s235 = smul.u32 2, %s30
        %s236 = smul.u32 2, %s30
        %s237 = smul.u32 2, %s30
        %v239 = vld [vmem:[%s203] sm:$0xf]
        %v240 = vld [vmem:[%s203 + $0x4] sm:$0xf]
        %v241 = vld [vmem:[#allocation5] sm:$0xff]
        %v242 = vld [vmem:[#allocation5 + $0x8] sm:$0xff]
        %v243 = vld [vmem:[#allocation5 + $0x10] sm:$0xff]
        %v244 = vld [vmem:[#allocation5 + $0x18] sm:$0xff]
        %v247 = vunpack.c.l.b16 %v239
        %v248 = vunpack.c.l.b16 %v240
        %v249 = vpack.c.b16 %v248, %v247
        %v254 = vunpack.c.l.b16 %v241
        %v255 = vunpack.c.h.b16 %v241
        %v256 = vunpack.c.l.b16 %v242
        %v257 = vunpack.c.h.b16 %v242
        %v258 = vunpack.c.l.b16 %v243
        %v259 = vunpack.c.h.b16 %v243
        %v260 = vunpack.c.l.b16 %v244
        %v261 = vunpack.c.h.b16 %v244
        %v262 = vpack.c.b16 %v256, %v254
        %v263 = vpack.c.b16 %v257, %v255
        %v264 = vpack.c.b16 %v260, %v258
        %v265 = vpack.c.b16 %v261, %v259
        %vm270 = vcmask 261120
        %v272 = vsel %vm270, %v249, 0
        %274 = vmatprep.subr.bf16.mxu0 %v263
        %275 = vmatpush1.bf16.msra.mxu0 %v262
        %276 = vmatprep.subr.bf16.mxu0 %v265
        %277 = vmatpush1.bf16.msra.mxu0 %v264
        %278 = vmatprep.subr.bf16.mxu0 0
        %279 = vmatpush1.bf16.msra.mxu0 0
        %280 = vmatprep.subr.bf16.mxu0 0
        %281 = vmatpush1.bf16.msra.mxu0 0
        %282 = vmatprep.subr.bf16.mxu0 0
        %283 = vmatpush1.bf16.msra.mxu0 0
        %284 = vmatprep.subr.bf16.mxu0 0
        %285 = vmatpush1.bf16.msra.mxu0 0
        %286 = vmatprep.subr.bf16.mxu0 0
        %287 = vmatpush1.bf16.msra.mxu0 0
        %288 = vmatprep.subr.bf16.mxu0 0
        %289 = vmatpush1.bf16.msra.mxu0 0
        %290 = vmatprep.subr.bf16.mxu0 0
        %291 = vmatpush1.bf16.msra.mxu0 0
        %292 = vmatprep.subr.bf16.mxu0 0
        %293 = vmatpush1.bf16.msra.mxu0 0
        %294 = vmatprep.subr.bf16.mxu0 0
        %295 = vmatpush1.bf16.msra.mxu0 0
        %296 = vmatprep.subr.bf16.mxu0 0
        %297 = vmatpush1.bf16.msra.mxu0 0
        %298 = vmatprep.subr.bf16.mxu0 0
        %299 = vmatpush1.bf16.msra.mxu0 0
        %300 = vmatprep.subr.bf16.mxu0 0
        %301 = vmatpush1.bf16.msra.mxu0 0
        %302 = vmatprep.subr.bf16.mxu0 0
        %303 = vmatpush1.bf16.msra.mxu0 0
        %304 = vmatprep.subr.bf16.mxu0 0
        %305 = vmatpush1.bf16.msra.mxu0 0
        %306 = vmatprep.mubr.bf16.mxu0 0
        %307 = vmatmul.mubr.bf16.gmra.mrb[0].mxu0 %v272
        %v308 = vpop.f32.mrb[0].mxu0
        %v309 = vadd.f32 0.0, %v308
        %v310 = vpop.f32.mrb[0].mxu0
        %v311 = vadd.f32 0.0, %v310
        %v312 = vpop.f32.mrb[0].mxu0
        %v313 = vadd.f32 0.0, %v312
        %v314 = vpop.f32.mrb[0].mxu0
        %v315 = vadd.f32 0.0, %v314
        %316 = vdwg.mxu0
        %v317 = vpack.c.bf16 %v313, %v309
        %v319 = vunpack.c.l.b16 %v317
        %v320 = vunpack.c.h.b16 %v317
        %v321 = vpack.c.b16 %v319, %v319
        %v322 = vpack.c.b16 %v320, %v320
        %325 = vst [vmem:[%s227] sm:$0xf] %v321
        %326 = vst [vmem:[%s227 + $0x4] sm:$0xf] %v322
        %v327 = vpack.c.bf16 %v315, %v311
        %v329 = vunpack.c.l.b16 %v327
        %v330 = vunpack.c.h.b16 %v327
        %v331 = vpack.c.b16 %v329, %v329
        %v332 = vpack.c.b16 %v330, %v330
        %335 = vst [vmem:[%s234] sm:$0xf] %v331
        %336 = vst [vmem:[%s234 + $0x4] sm:$0xf] %v332
        %s337 = sand.u32 %s96, 1
        %s338 = scalar_lea.sflag [#allocation4], %s337
        %s339 = sand.u32 %s96, 1
        %s340 = smul.addr %s339, 8
        %s341 = scalar_lea.vmem [#allocation7], %s340
        %s342 = sand.u32 %s124, 1
        %s343 = scalar_lea.sflag [#allocation9], %s342
        %s344 = sand.u32 %s124, 1
        %s345 = smul.addr %s344, 8
        %s346 = scalar_lea.vmem [#allocation8], %s345
        // Predicated region
        $region37: #{tpu_custom_call.1} parent=27 // pred_check
          %p347 = pneg %p106
        $region38: #{tpu_custom_call.1} parent=27 // pred_check_branch
          %349 = sbr.rel (%p347) target = $region40
        $region39: #{tpu_custom_call.1} parent=27 // pred_region
          %s350 = smul.u32 2, %s30
          %s352 = ssub.s32 128, 128
          %353 = vsyncadd %s338, %s352
          %s354 = smul.addr %s29, 2
          %s355 = sadd.s32 %s350, %s354
          %s356 = smul.addr %s355, 64
          %s357 = scalar_lea.hbm %s2, %s356
          %s358 = sshll.u32 %s341, 4
          %s359 = int_to_ptr.vmem [resolvable:$true] %s358
          %364 = dma.vmem_to_hbm [thread:$0]  %s359, 128, %s357, %s338, 64, 64, 4
        $region40: #{tpu_custom_call.1} parent=27 // pred_fallthru
          _
        // Predicated region
        $region41: #{tpu_custom_call.1} parent=27 // pred_check
          %p365 = pneg %p134
        $region42: #{tpu_custom_call.1} parent=27 // pred_check_branch
          %367 = sbr.rel (%p365) target = $region44
        $region43: #{tpu_custom_call.1} parent=27 // pred_region
          %s368 = smul.u32 2, %s30
          %s370 = ssub.s32 128, 128
          %371 = vsyncadd %s343, %s370
          %s372 = smul.addr %s29, 2
          %s373 = sadd.s32 %s368, %s372
          %s374 = smul.addr %s373, 64
          %s375 = scalar_lea.hbm %s3, %s374
          %s376 = sshll.u32 %s346, 4
          %s377 = int_to_ptr.vmem [resolvable:$true] %s376
          %382 = dma.vmem_to_hbm [thread:$0]  %s377, 128, %s375, %s343, 64, 64, 4
        $region44: #{tpu_custom_call.1} parent=27 // pred_fallthru
          _
      $region28: #{tpu_custom_call.1} parent=5 // pred_fallthru
        _
      %p383 = scmp.le.s32.totalorder 2, %s20
      // Predicated region
      $region45: #{tpu_custom_call.1} parent=5 // pred_check
        %p384 = pneg %p383
      $region46: #{tpu_custom_call.1} parent=5 // pred_check_branch
        %386 = sbr.rel (%p384) target = $region48
      $region47: #{tpu_custom_call.1} parent=5 // pred_region
        %s387 = ssub.s32 %s20, 2
        // Predicated region
        $region49: #{tpu_custom_call.1} parent=47 // pred_check
          %p388 = pneg %p112
        $region50: #{tpu_custom_call.1} parent=47 // pred_check_branch
          %390 = sbr.rel (%p388) target = $region52
        $region51: #{tpu_custom_call.1} parent=47 // pred_region
          %s391 = sand.u32 %s97, 1
          %s392 = scalar_lea.sflag [#allocation4], %s391
          %s393 = sand.u32 %s97, 1
          %s394 = smul.addr %s393, 8
          %s395 = scalar_lea.vmem [#allocation7], %s394
          %396 = dma.done %s392, 128
        $region52: #{tpu_custom_call.1} parent=47 // pred_fallthru
          _
        // Predicated region
        $region53: #{tpu_custom_call.1} parent=47 // pred_check
          %p397 = pneg %p140
        $region54: #{tpu_custom_call.1} parent=47 // pred_check_branch
          %399 = sbr.rel (%p397) target = $region56
        $region55: #{tpu_custom_call.1} parent=47 // pred_region
          %s400 = sand.u32 %s125, 1
          %s401 = scalar_lea.sflag [#allocation9], %s400
          %s402 = sand.u32 %s125, 1
          %s403 = smul.addr %s402, 8
          %s404 = scalar_lea.vmem [#allocation8], %s403
          %405 = dma.done %s401, 128
        $region56: #{tpu_custom_call.1} parent=47 // pred_fallthru
          _
      $region48: #{tpu_custom_call.1} parent=5 // pred_fallthru
        _
    $region6: #{tpu_custom_call.1} parent=1 // loop_footer
      %s24 = sadd.s32 1, %s20
    $region7: #{tpu_custom_call.1} parent=1 // loop_footer_branch
      %19 = sbr.rel target = $region3
    $region8: #{tpu_custom_call.1} parent=1 // loop_exit
      _
    %406 = vsyncpa [#allocation3], 1
    %s407 = scalar_lea.sflag [#allocation3], 1
    %408 = vsyncpa %s407, 1
    %409 = vsyncpa [#allocation6], 1
    %410 = vsyncpa [#allocation4], 1
    %s411 = scalar_lea.sflag [#allocation4], 1
    %412 = vsyncpa %s411, 1
    %413 = vsyncpa [#allocation9], 1
    %s414 = scalar_lea.sflag [#allocation9], 1
    %415 = vsyncpa %s414, 1

</llo_original>
